<compile_context>
chip_gen: v7x
topology: tpu7x:2x2x1
jax: 0.10.0
libtpu: 0.0.40
codegen_flags: <defaults>
</compile_context>

<pallas_src>
import functools

import jax
import jax.numpy as jnp
from jax.experimental import pallas as pl
from jax.experimental.pallas import tpu as pltpu


def _leaky_sigmoid_kernel(x_ref, o_ref, *, compute_dtype):
    x = x_ref[...].astype(compute_dtype)
    # sigmoid(x) == 0.5 * tanh(0.5 * x) + 0.5  -> one EUP op per element.
    y = jnp.tanh(x * 0.5) * 0.5 + 0.5 + x * 0.001
    o_ref[...] = y.astype(o_ref.dtype)


def _has_low_precision_eup() -> bool:
    """True on TPU generations with a bf16 VPU/EUP (v6e, v7x)."""
    try:
        kind = jax.devices()[0].device_kind.lower()
    except Exception:
        return False
    return ("v6" in kind) or ("v7" in kind)


@functools.partial(jax.jit, static_argnames=("target_block_bytes",))
def leaky_sigmoid(x, *, target_block_bytes: int = 4 * 1024 * 1024):
    """Elementwise sigmoid(x) + 0.001*x via a single Pallas TPU kernel."""
    orig_shape = x.shape
    dtype = x.dtype
    total = x.size
    if total == 0:
        return x

    itemsize = jnp.dtype(dtype).itemsize
    # Minimum tile: (sublane-packing, 128) lanes -> 8*128 f32, 16*128 bf16, ...
    sub = max(8, 32 // max(itemsize, 1))
    min_blk = sub * 128

    # Compute dtype: native bf16/f16 on chips with a bf16 EUP, else f32.
    if dtype in (jnp.bfloat16, jnp.float16) and _has_low_precision_eup():
        compute_dtype = dtype
    else:
        compute_dtype = jnp.float32
    kernel = functools.partial(_leaky_sigmoid_kernel, compute_dtype=compute_dtype)

    # ~4 MiB per block (per buffer), aligned down to the minimum tile.
    blk = max(min_blk, (target_block_bytes // itemsize) // min_blk * min_blk)

    x_flat = x.reshape(-1)  # contiguous reshape: no HBM copy

    if total % 128 == 0:
        # Lane-dense 2-D layout: (rows, 128), blocked along rows.
        rows = total // 128
        arr = x_flat.reshape(rows, 128)
        tr = blk // 128                      # multiple of `sub` by construction
        if rows > 2 * sub:                   # keep >= 2 blocks (v7x: both TCs get work)
            tr = min(tr, pl.cdiv(pl.cdiv(rows, 2), sub) * sub)
        if tr >= rows:
            tr = rows                        # single full-extent block (exempt)
        grid = (pl.cdiv(rows, tr),)
        block_shape = (tr, 128)
        index_map = lambda i: (i, 0)
        out_struct = jax.ShapeDtypeStruct((rows, 128), dtype)
    else:
        # Ragged total: 1-D layout; Pallas masks the ragged final block.
        arr = x_flat
        if total <= min_blk:
            blk1 = total                     # single full-extent block (exempt)
        else:
            blk1 = min(blk, (total // min_blk) * min_blk)
            if total > 2 * min_blk:          # keep >= 2 blocks for medium tensors
                blk1 = min(blk1, pl.cdiv(pl.cdiv(total, 2), min_blk) * min_blk)
        grid = (pl.cdiv(total, blk1),)
        block_shape = (blk1,)
        index_map = lambda i: (i,)
        out_struct = jax.ShapeDtypeStruct((total,), dtype)

    out = pl.pallas_call(
        kernel,
        out_shape=out_struct,
        grid_spec=pltpu.PrefetchScalarGridSpec(
            num_scalar_prefetch=0,
            grid=grid,
            in_specs=[pl.BlockSpec(block_shape, index_map)],
            out_specs=pl.BlockSpec(block_shape, index_map),
        ),
        compiler_params=pltpu.CompilerParams(
            # "parallel" lets multi-TensorCore chips (v7x) shard the grid axis.
            dimension_semantics=("parallel",),
            # 4 MiB blocks double-buffered in+out (= 16 MiB) + elementwise
            # temporaries: raise v5e's 16 MiB scoped default, stay within
            # v7x's 32 MiB scoped budget.
            vmem_limit_bytes=32 * 1024 * 1024,
        ),
    )(arr)

    return out.reshape(orig_shape)


if __name__ == "__main__":
    key = jax.random.PRNGKey(0)

    # Primary case: NCHW activation tensor as the module would see.
    x = jax.random.normal(key, (2, 4, 16, 16), dtype=jnp.float32)
    y = leaky_sigmoid(x)
    jax.block_until_ready(y)
    y_ref = jax.nn.sigmoid(x) + x * 0.001
    assert y.shape == x.shape and y.dtype == x.dtype
    assert float(jnp.max(jnp.abs(y - y_ref))) < 1e-5

    # Ragged case (size not a multiple of 128): exercises the single-kernel
    # 1-D path with a masked partial final block (no slice / pad / concat).
    x2 = jax.random.normal(jax.random.PRNGKey(1), (3, 5, 7, 11), dtype=jnp.float32)
    y2 = leaky_sigmoid(x2)
    jax.block_until_ready(y2)
    y2_ref = jax.nn.sigmoid(x2) + x2 * 0.001
    assert y2.shape == x2.shape and y2.dtype == x2.dtype
    assert float(jnp.max(jnp.abs(y2 - y2_ref))) < 1e-5

    print("KERNEL_OK")
</pallas_src>

<mosaic_0001>
module attributes {stable_mosaic.version = 11 : i64} {
  func.func @_leaky_sigmoid_kernel(%arg0: i32, %arg1: memref<16x128xf32, #tpu.memory_space<vmem>>, %arg2: memref<16x128xf32, #tpu.memory_space<vmem>>) attributes {dimension_semantics = [#tpu.dimension_semantics<parallel>], iteration_bounds = array<i64: 1>, scalar_prefetch = 0 : i64, scratch_operands = 0 : i64, tpu.core_type = #tpu.core_type<tc>, window_params = [{transform_indices = @transform_0, window_bounds = array<i64: 16, 128>}, {transform_indices = @transform_1, window_bounds = array<i64: 16, 128>}]} {
    %c0 = arith.constant 0 : index
    %c0_0 = arith.constant 0 : index
    %0 = vector.load %arg1[%c0, %c0_0] : memref<16x128xf32, #tpu.memory_space<vmem>>, vector<16x128xf32>
    %cst = arith.constant 5.000000e-01 : f32
    %1 = vector.broadcast %cst : f32 to vector<16x128xf32>
    %2 = arith.mulf %0, %1 : vector<16x128xf32>
    %3 = math.tanh %2 : vector<16x128xf32>
    %cst_1 = arith.constant 5.000000e-01 : f32
    %4 = vector.broadcast %cst_1 : f32 to vector<16x128xf32>
    %5 = arith.mulf %3, %4 : vector<16x128xf32>
    %cst_2 = arith.constant 5.000000e-01 : f32
    %6 = vector.broadcast %cst_2 : f32 to vector<16x128xf32>
    %7 = arith.addf %5, %6 : vector<16x128xf32>
    %cst_3 = arith.constant 1.000000e-03 : f32
    %8 = vector.broadcast %cst_3 : f32 to vector<16x128xf32>
    %9 = arith.mulf %0, %8 : vector<16x128xf32>
    %10 = arith.addf %7, %9 : vector<16x128xf32>
    %c0_4 = arith.constant 0 : index
    %c0_5 = arith.constant 0 : index
    %11 = vector.load %arg2[%c0_4, %c0_5] : memref<16x128xf32, #tpu.memory_space<vmem>>, vector<16x128xf32>
    tpu.vector_store %arg2[%c0_4, %c0_5], %10 {strides = array<i32>} : memref<16x128xf32, #tpu.memory_space<vmem>>, vector<16x128xf32>,
    return
  }
  func.func @transform_0(%arg0: i32) -> (i32, i32) {
    %c0_i32 = arith.constant 0 : i32
    %c0_i32_0 = arith.constant 0 : i32
    return %arg0, %c0_i32 : i32, i32
  }
  func.func @transform_1(%arg0: i32) -> (i32, i32) {
    %c0_i32 = arith.constant 0 : i32
    %c0_i32_0 = arith.constant 0 : i32
    return %arg0, %c0_i32 : i32, i32
  }
}

</mosaic_0001>

<llo_original>
// kernel: leaky_sigmoid.1
$region0: #{leaky_sigmoid.1}
  #allocation0 [shape = 'u32[]', space=smem, size = 0x4, offset = 0x4, fixed_abs, tag = 'smem constant byte address 0x4 - core index']
  #allocation1 [shape = 'u32[144,128]{1,0:T(1,128)}', space=vmem, size = 0x12000, scoped, tag = 'internal scratch']
  %s0 = inlined_call_operand.vmem [shape: f32[16,128], index: 0, kind: input, shape index: {}]
  %s1 = inlined_call_operand.vmem [shape: f32[16,128], index: 1, kind: output, shape index: {}]
  %s2 = sld [smem:[#allocation0]]
  $region14: #{leaky_sigmoid.1} parent=0
    _
  %s4 = ssub.s32 1, %s2
  %s5 = scalar_select 0, %s4, %s2
  // Predicated region
  $region2: #{leaky_sigmoid.1} parent=0 // pred_check
    _
  $region3: #{leaky_sigmoid.1} parent=0 // pred_check_branch
    %7 = sbr.rel (0) target = $region5
  $region4: #{leaky_sigmoid.1} parent=0 // pred_region
    _
  $region5: #{leaky_sigmoid.1} parent=0 // pred_fallthru
    _
  %v8 = vld [vmem:[%s0] sm:$0xff]
  %v9 = vld [vmem:[%s0 + $0x8] sm:$0xff]
  %v10 = vmul.f32 %v8, 0.5
  %v11 = vmul.f32 %v9, 0.5
  %v12 = vtanh.pop %v10
  %v13 = vtanh.pop %v11
  %v14 = vmul.f32 %v12, 0.5
  %v15 = vmul.f32 %v13, 0.5
  %v16 = vadd.f32 %v14, 0.5
  %v17 = vadd.f32 %v15, 0.5
  %v18 = vmul.f32 %v8, 0.001
  %v19 = vmul.f32 %v9, 0.001
  %v20 = vadd.f32 %v16, %v18
  %v21 = vadd.f32 %v17, %v19
  %22 = vst [vmem:[%s1] sm:$0xff] %v20
  %23 = vst [vmem:[%s1 + $0x8] sm:$0xff] %v21
  // Predicated region
  $region6: #{leaky_sigmoid.1} parent=0 // pred_check
    _
  $region7: #{leaky_sigmoid.1} parent=0 // pred_check_branch
    %25 = sbr.rel (0) target = $region9
  $region8: #{leaky_sigmoid.1} parent=0 // pred_region
    _
  $region9: #{leaky_sigmoid.1} parent=0 // pred_fallthru
    _
  // Predicated region
  $region10: #{leaky_sigmoid.1} parent=0 // pred_check
    _
  $region11: #{leaky_sigmoid.1} parent=0 // pred_check_branch
    %27 = sbr.rel (0) target = $region13
  $region12: #{leaky_sigmoid.1} parent=0 // pred_region
    _
  $region13: #{leaky_sigmoid.1} parent=0 // pred_fallthru
    _

</llo_original>
